<compile_context>
chip_gen: v7x
topology: tpu7x:2x2x1
jax: 0.10.0
libtpu: 0.0.40
codegen_flags: <defaults>
</compile_context>

<pallas_src>
import numpy as np
import jax
import jax.numpy as jnp
from jax.experimental import pallas as pl
from jax.experimental.pallas import tpu as pltpu

LANE = 128


def _round_up(x, m):
    return (x + m - 1) // m * m


def _make_kernel(num_actions, n_rest):
    """num_actions / n_rest are static (baked into the traced kernel)."""

    def kernel(x_ref, w0_ref, b0_ref, wr_ref, br_ref, wh_ref, bh_ref,
               p_ref, v_ref):
        # x_ref : (TILE_B, Din_pad)              compute dtype
        # w0_ref: (Din_pad, H_pad), b0_ref: (1, H_pad) f32
        # wr_ref: (Lr, H_pad, H_pad), br_ref: (Lr, 1, H_pad) f32
        # wh_ref: (H_pad, HEAD_pad), bh_ref: (1, HEAD_pad) f32
        # p_ref : (TILE_B, HEAD_pad) f32  (softmax; cols >= A are ~0)
        # v_ref : (TILE_B, HEAD_pad) f32  (tanh of head logits; col A = value)
        cd = w0_ref.dtype

        # hidden layer 0  (MXU, f32 accumulation)
        h = jnp.dot(x_ref[...], w0_ref[...], preferred_element_type=jnp.float32)
        h = jnp.maximum(h + b0_ref[...], 0.0)

        # remaining hidden layers — static unroll, tiny layer count in this module
        for l in range(n_rest):
            h = jnp.dot(h.astype(cd), wr_ref[l],
                        preferred_element_type=jnp.float32)
            h = jnp.maximum(h + br_ref[l], 0.0)

        # fused policy+value head: one (TILE_B, H_pad) @ (H_pad, HEAD_pad) matmul
        logits = jnp.dot(h.astype(cd), wh_ref[...],
                         preferred_element_type=jnp.float32) + bh_ref[...]

        # value head: tanh over the whole padded slab (EUP); wrapper slices col A
        v_ref[...] = jnp.tanh(logits)

        # policy head: softmax over the first `num_actions` lanes only
        col = jax.lax.broadcasted_iota(jnp.int32, logits.shape, 1)
        masked = jnp.where(col < num_actions, logits, -1e30)
        m = jnp.max(masked, axis=-1, keepdims=True)
        e = jnp.exp(masked - m)                      # padded cols underflow to 0
        inv = pl.reciprocal(jnp.sum(e, axis=-1, keepdims=True), approx=False)
        p_ref[...] = e * inv

    return kernel


def alphazero_forward_pallas(x, params, *, compute_dtype=jnp.float32,
                             tile_b=None):
    """x: (B, Din) float32 -> (policy (B, 7) f32, value (B, 1) f32)."""
    B, Din = x.shape
    w_hidden, b_hidden = params["w_hidden"], params["b_hidden"]
    n_layers = len(w_hidden)
    H = w_hidden[0].shape[0]                 # hidden width (= n_hidden)
    A = params["w_policy"].shape[0]          # 7 actions

    Din_pad = _round_up(Din, LANE)
    H_pad = _round_up(H, LANE)
    HEAD_pad = _round_up(A + 1, LANE)        # policy cols [0,A), value col A

    if tile_b is None:
        tile_b = min(128, _round_up(B, 8))   # fill MXU rows, >=8 sublanes
    B_pad = _round_up(B, tile_b)

    # ---- host-side layout prep (transpose + zero-pad only, no compute) ----
    x_p = jnp.zeros((B_pad, Din_pad), compute_dtype)
    x_p = x_p.at[:B, :Din].set(x.astype(compute_dtype))

    w0 = jnp.zeros((Din_pad, H_pad), compute_dtype)
    w0 = w0.at[:Din, :H].set(w_hidden[0].T.astype(compute_dtype))
    b0 = jnp.zeros((1, H_pad), jnp.float32).at[0, :H].set(b_hidden[0])

    n_rest = n_layers - 1
    Lr = max(n_rest, 1)
    wr = jnp.zeros((Lr, H_pad, H_pad), compute_dtype)
    br = jnp.zeros((Lr, 1, H_pad), jnp.float32)
    for l in range(n_rest):
        wr = wr.at[l, :H, :H].set(w_hidden[l + 1].T.astype(compute_dtype))
        br = br.at[l, 0, :H].set(b_hidden[l + 1])

    wh = jnp.zeros((H_pad, HEAD_pad), compute_dtype)
    wh = wh.at[:H, :A].set(params["w_policy"].T.astype(compute_dtype))
    wh = wh.at[:H, A].set(params["w_value"][0].astype(compute_dtype))
    bh = jnp.zeros((1, HEAD_pad), jnp.float32)
    bh = bh.at[0, :A].set(params["b_policy"])
    bh = bh.at[0, A].set(params["b_value"][0])

    kernel = _make_kernel(A, n_rest)
    full = lambda shape: pl.BlockSpec(shape, lambda i, _s=shape: (0,) * len(_s))

    p_full, v_full = pl.pallas_call(
        kernel,
        out_shape=(jax.ShapeDtypeStruct((B_pad, HEAD_pad), jnp.float32),
                   jax.ShapeDtypeStruct((B_pad, HEAD_pad), jnp.float32)),
        grid_spec=pltpu.PrefetchScalarGridSpec(
            num_scalar_prefetch=0,
            grid=(B_pad // tile_b,),
            in_specs=[
                pl.BlockSpec((tile_b, Din_pad), lambda i: (i, 0)),   # x (batch tiled)
                full((Din_pad, H_pad)),                              # W0^T
                full((1, H_pad)),                                    # b0
                full((Lr, H_pad, H_pad)),                            # stacked hidden W^T
                full((Lr, 1, H_pad)),                                # stacked hidden b
                full((H_pad, HEAD_pad)),                             # fused head W
                full((1, HEAD_pad)),                                 # fused head b
            ],
            out_specs=(pl.BlockSpec((tile_b, HEAD_pad), lambda i: (i, 0)),
                       pl.BlockSpec((tile_b, HEAD_pad), lambda i: (i, 0))),
        ),
        compiler_params=pltpu.CompilerParams(
            dimension_semantics=("parallel",)),
    )(x_p, w0, b0, wr, br, wh, bh)

    policy = p_full[:B, :A]
    value = v_full[:B, A:A + 1]
    return policy, value


def alphazero_forward_reference(x, params):
    """Pure-JAX mirror of the PyTorch forward."""
    z = x
    for W, b in zip(params["w_hidden"], params["b_hidden"]):
        z = jnp.maximum(z @ W.T + b, 0.0)
    logits_p = z @ params["w_policy"].T + params["b_policy"]
    logits_v = z @ params["w_value"].T + params["b_value"]
    return jax.nn.softmax(logits_p, axis=-1), jnp.tanh(logits_v)


def make_params(key, in_features, n_hidden, num_actions=7):
    keys = jax.random.split(key, 2 * n_hidden + 4)
    w_hidden, b_hidden = [], []
    fan_in = in_features
    idx = 0
    for _ in range(n_hidden):
        w_hidden.append(jax.random.normal(keys[idx], (n_hidden, fan_in),
                                          jnp.float32) / (fan_in ** 0.5))
        idx += 1
        b_hidden.append(0.1 * jax.random.normal(keys[idx], (n_hidden,),
                                                jnp.float32))
        idx += 1
        fan_in = n_hidden
    w_value = jax.random.normal(keys[idx], (1, n_hidden), jnp.float32) / (n_hidden ** 0.5)
    idx += 1
    b_value = 0.1 * jax.random.normal(keys[idx], (1,), jnp.float32)
    idx += 1
    w_policy = jax.random.normal(keys[idx], (num_actions, n_hidden),
                                 jnp.float32) / (n_hidden ** 0.5)
    idx += 1
    b_policy = 0.1 * jax.random.normal(keys[idx], (num_actions,), jnp.float32)
    return {
        "w_hidden": w_hidden, "b_hidden": b_hidden,
        "w_value": w_value, "b_value": b_value,
        "w_policy": w_policy, "b_policy": b_policy,
    }


if __name__ == "__main__":
    # Small shapes consistent with the module: DummyAlphaZeroNet(n_hidden=4, hidden_size=32)
    # applied to a flat feature vector of size 32.  `hidden_size` is unused by the
    # module's own forward (LazyLinear(n_hidden) everywhere).
    B, IN_FEATURES, N_HIDDEN, NUM_ACTIONS = 8, 32, 4, 7

    key = jax.random.PRNGKey(0)
    kx, kp = jax.random.split(key)
    x = jax.random.normal(kx, (B, IN_FEATURES), jnp.float32)
    params = make_params(kp, IN_FEATURES, N_HIDDEN, NUM_ACTIONS)

    # f32 here for tight verification; pass compute_dtype=jnp.bfloat16 on v6e/v7x
    # for MXU throughput (accumulation stays f32 inside the kernel).
    policy, value = alphazero_forward_pallas(x, params)
    policy = jax.block_until_ready(policy)
    value = jax.block_until_ready(value)

    policy_ref, value_ref = alphazero_forward_reference(x, params)
    np.testing.assert_allclose(np.asarray(policy), np.asarray(policy_ref),
                               rtol=1e-5, atol=1e-5)
    np.testing.assert_allclose(np.asarray(value), np.asarray(value_ref),
                               rtol=1e-5, atol=1e-5)
    np.testing.assert_allclose(np.asarray(policy).sum(axis=1), np.ones(B),
                               rtol=1e-5, atol=1e-5)

    print("KERNEL_OK")
</pallas_src>

<mosaic_0001>
module attributes {stable_mosaic.version = 11 : i64} {
  func.func @kernel(%arg0: i32, %arg1: memref<8x128xf32, #tpu.memory_space<vmem>>, %arg2: memref<128x128xf32, #tpu.memory_space<vmem>>, %arg3: memref<1x128xf32, #tpu.memory_space<vmem>>, %arg4: memref<3x128x128xf32, #tpu.memory_space<vmem>>, %arg5: memref<3x1x128xf32, #tpu.memory_space<vmem>>, %arg6: memref<128x128xf32, #tpu.memory_space<vmem>>, %arg7: memref<1x128xf32, #tpu.memory_space<vmem>>, %arg8: memref<8x128xf32, #tpu.memory_space<vmem>>, %arg9: memref<8x128xf32, #tpu.memory_space<vmem>>) attributes {dimension_semantics = [#tpu.dimension_semantics<parallel>], iteration_bounds = array<i64: 1>, scalar_prefetch = 0 : i64, scratch_operands = 0 : i64, tpu.core_type = #tpu.core_type<tc>, window_params = [{transform_indices = @transform_0, window_bounds = array<i64: 8, 128>}, {pipeline_mode = #tpu.pipeline_mode<synchronous>, transform_indices = @transform_1, window_bounds = array<i64: 128, 128>}, {pipeline_mode = #tpu.pipeline_mode<synchronous>, transform_indices = @transform_2, window_bounds = array<i64: 1, 128>}, {pipeline_mode = #tpu.pipeline_mode<synchronous>, transform_indices = @transform_3, window_bounds = array<i64: 3, 128, 128>}, {pipeline_mode = #tpu.pipeline_mode<synchronous>, transform_indices = @transform_4, window_bounds = array<i64: 3, 1, 128>}, {pipeline_mode = #tpu.pipeline_mode<synchronous>, transform_indices = @transform_5, window_bounds = array<i64: 128, 128>}, {pipeline_mode = #tpu.pipeline_mode<synchronous>, transform_indices = @transform_6, window_bounds = array<i64: 1, 128>}, {transform_indices = @transform_7, window_bounds = array<i64: 8, 128>}, {transform_indices = @transform_8, window_bounds = array<i64: 8, 128>}]} {
    %c0 = arith.constant 0 : index
    %c0_0 = arith.constant 0 : index
    %0 = vector.load %arg1[%c0, %c0_0] : memref<8x128xf32, #tpu.memory_space<vmem>>, vector<8x128xf32>
    %c0_1 = arith.constant 0 : index
    %c0_2 = arith.constant 0 : index
    %1 = vector.load %arg2[%c0_1, %c0_2] : memref<128x128xf32, #tpu.memory_space<vmem>>, vector<128x128xf32>
    %cst = arith.constant dense<0.000000e+00> : vector<8x128xf32>
    %2 = tpu.matmul %0, %1, %cst {dimension_numbers = #tpu.dot_dimension_numbers<[1], [0], [0], [1], [0, 0, 1, 1], [], []>} : vector<8x128xf32>, vector<128x128xf32>, vector<8x128xf32> -> vector<8x128xf32>
    %c0_3 = arith.constant 0 : index
    %c0_4 = arith.constant 0 : index
    %3 = vector.load %arg3[%c0_3, %c0_4] : memref<1x128xf32, #tpu.memory_space<vmem>>, vector<1x128xf32>
    %4 = vector.broadcast %3 : vector<1x128xf32> to vector<8x128xf32>
    %5 = arith.addf %2, %4 : vector<8x128xf32>
    %cst_5 = arith.constant 0.000000e+00 : f32
    %6 = vector.broadcast %cst_5 : f32 to vector<8x128xf32>
    %7 = arith.maximumf %5, %6 : vector<8x128xf32>
    %c0_6 = arith.constant 0 : index
    %c0_7 = arith.constant 0 : index
    %c0_8 = arith.constant 0 : index
    %8 = vector.load %arg4[%c0_6, %c0_7, %c0_8] : memref<3x128x128xf32, #tpu.memory_space<vmem>>, vector<1x128x128xf32>
    %9 = vector.shape_cast %8 : vector<1x128x128xf32> to vector<128x128xf32>
    %cst_9 = arith.constant dense<0.000000e+00> : vector<8x128xf32>
    %10 = tpu.matmul %7, %9, %cst_9 {dimension_numbers = #tpu.dot_dimension_numbers<[1], [0], [0], [1], [0, 0, 1, 1], [], []>} : vector<8x128xf32>, vector<128x128xf32>, vector<8x128xf32> -> vector<8x128xf32>
    %c0_10 = arith.constant 0 : index
    %c0_11 = arith.constant 0 : index
    %c0_12 = arith.constant 0 : index
    %11 = vector.load %arg5[%c0_10, %c0_11, %c0_12] : memref<3x1x128xf32, #tpu.memory_space<vmem>>, vector<1x1x128xf32>
    %12 = vector.shape_cast %11 : vector<1x1x128xf32> to vector<1x128xf32>
    %13 = vector.broadcast %12 : vector<1x128xf32> to vector<8x128xf32>
    %14 = arith.addf %10, %13 : vector<8x128xf32>
    %cst_13 = arith.constant 0.000000e+00 : f32
    %15 = vector.broadcast %cst_13 : f32 to vector<8x128xf32>
    %16 = arith.maximumf %14, %15 : vector<8x128xf32>
    %c1 = arith.constant 1 : index
    %c0_14 = arith.constant 0 : index
    %c0_15 = arith.constant 0 : index
    %17 = vector.load %arg4[%c1, %c0_14, %c0_15] : memref<3x128x128xf32, #tpu.memory_space<vmem>>, vector<1x128x128xf32>
    %18 = vector.shape_cast %17 : vector<1x128x128xf32> to vector<128x128xf32>
    %cst_16 = arith.constant dense<0.000000e+00> : vector<8x128xf32>
    %19 = tpu.matmul %16, %18, %cst_16 {dimension_numbers = #tpu.dot_dimension_numbers<[1], [0], [0], [1], [0, 0, 1, 1], [], []>} : vector<8x128xf32>, vector<128x128xf32>, vector<8x128xf32> -> vector<8x128xf32>
    %c1_17 = arith.constant 1 : index
    %c0_18 = arith.constant 0 : index
    %c0_19 = arith.constant 0 : index
    %20 = vector.load %arg5[%c1_17, %c0_18, %c0_19] : memref<3x1x128xf32, #tpu.memory_space<vmem>>, vector<1x1x128xf32>
    %21 = vector.shape_cast %20 : vector<1x1x128xf32> to vector<1x128xf32>
    %22 = vector.broadcast %21 : vector<1x128xf32> to vector<8x128xf32>
    %23 = arith.addf %19, %22 : vector<8x128xf32>
    %cst_20 = arith.constant 0.000000e+00 : f32
    %24 = vector.broadcast %cst_20 : f32 to vector<8x128xf32>
    %25 = arith.maximumf %23, %24 : vector<8x128xf32>
    %c2 = arith.constant 2 : index
    %c0_21 = arith.constant 0 : index
    %c0_22 = arith.constant 0 : index
    %26 = vector.load %arg4[%c2, %c0_21, %c0_22] : memref<3x128x128xf32, #tpu.memory_space<vmem>>, vector<1x128x128xf32>
    %27 = vector.shape_cast %26 : vector<1x128x128xf32> to vector<128x128xf32>
    %cst_23 = arith.constant dense<0.000000e+00> : vector<8x128xf32>
    %28 = tpu.matmul %25, %27, %cst_23 {dimension_numbers = #tpu.dot_dimension_numbers<[1], [0], [0], [1], [0, 0, 1, 1], [], []>} : vector<8x128xf32>, vector<128x128xf32>, vector<8x128xf32> -> vector<8x128xf32>
    %c2_24 = arith.constant 2 : index
    %c0_25 = arith.constant 0 : index
    %c0_26 = arith.constant 0 : index
    %29 = vector.load %arg5[%c2_24, %c0_25, %c0_26] : memref<3x1x128xf32, #tpu.memory_space<vmem>>, vector<1x1x128xf32>
    %30 = vector.shape_cast %29 : vector<1x1x128xf32> to vector<1x128xf32>
    %31 = vector.broadcast %30 : vector<1x128xf32> to vector<8x128xf32>
    %32 = arith.addf %28, %31 : vector<8x128xf32>
    %cst_27 = arith.constant 0.000000e+00 : f32
    %33 = vector.broadcast %cst_27 : f32 to vector<8x128xf32>
    %34 = arith.maximumf %32, %33 : vector<8x128xf32>
    %c0_28 = arith.constant 0 : index
    %c0_29 = arith.constant 0 : index
    %35 = vector.load %arg6[%c0_28, %c0_29] : memref<128x128xf32, #tpu.memory_space<vmem>>, vector<128x128xf32>
    %cst_30 = arith.constant dense<0.000000e+00> : vector<8x128xf32>
    %36 = tpu.matmul %34, %35, %cst_30 {dimension_numbers = #tpu.dot_dimension_numbers<[1], [0], [0], [1], [0, 0, 1, 1], [], []>} : vector<8x128xf32>, vector<128x128xf32>, vector<8x128xf32> -> vector<8x128xf32>
    %c0_31 = arith.constant 0 : index
    %c0_32 = arith.constant 0 : index
    %37 = vector.load %arg7[%c0_31, %c0_32] : memref<1x128xf32, #tpu.memory_space<vmem>>, vector<1x128xf32>
    %38 = vector.broadcast %37 : vector<1x128xf32> to vector<8x128xf32>
    %39 = arith.addf %36, %38 : vector<8x128xf32>
    %40 = math.tanh %39 : vector<8x128xf32>
    %c0_33 = arith.constant 0 : index
    %c0_34 = arith.constant 0 : index
    %41 = vector.load %arg9[%c0_33, %c0_34] : memref<8x128xf32, #tpu.memory_space<vmem>>, vector<8x128xf32>
    tpu.vector_store %arg9[%c0_33, %c0_34], %40 {strides = array<i32>} : memref<8x128xf32, #tpu.memory_space<vmem>>, vector<8x128xf32>,
    %42 = tpu.iota {dimensions = array<i32: 1>} : vector<8x128xi32>
    %c7_i32 = arith.constant 7 : i32
    %43 = vector.broadcast %c7_i32 : i32 to vector<8x128xi32>
    %44 = arith.cmpi slt, %42, %43 : vector<8x128xi32>
    %cst_35 = arith.constant -1.000000e+30 : f32
    %45 = vector.broadcast %cst_35 : f32 to vector<8x128xf32>
    %46 = arith.select %44, %39, %45 : vector<8x128xi1>, vector<8x128xf32>
    %cst_36 = arith.constant dense<0xFF800000> : vector<8xf32>
    %47 = vector.multi_reduction <maximumf>, %46, %cst_36 [1] : vector<8x128xf32> to vector<8xf32>
    %48 = vector.shape_cast %47 : vector<8xf32> to vector<8x1xf32>
    %49 = vector.broadcast %48 : vector<8x1xf32> to vector<8x128xf32>
    %50 = arith.subf %46, %49 : vector<8x128xf32>
    %51 = math.exp %50 : vector<8x128xf32>
    %cst_37 = arith.constant dense<0.000000e+00> : vector<8xf32>
    %52 = vector.multi_reduction <add>, %51, %cst_37 [1] : vector<8x128xf32> to vector<8xf32>
    %53 = vector.shape_cast %52 : vector<8xf32> to vector<8x1xf32>
    %54 = tpu.reciprocal %53 : vector<8x1xf32> -> vector<8x1xf32>
    %55 = vector.broadcast %54 : vector<8x1xf32> to vector<8x128xf32>
    %56 = arith.mulf %51, %55 : vector<8x128xf32>
    %c0_38 = arith.constant 0 : index
    %c0_39 = arith.constant 0 : index
    %57 = vector.load %arg8[%c0_38, %c0_39] : memref<8x128xf32, #tpu.memory_space<vmem>>, vector<8x128xf32>
    tpu.vector_store %arg8[%c0_38, %c0_39], %56 {strides = array<i32>} : memref<8x128xf32, #tpu.memory_space<vmem>>, vector<8x128xf32>,
    return
  }
  func.func @transform_0(%arg0: i32) -> (i32, i32) {
    %c0_i32 = arith.constant 0 : i32
    %c0_i32_0 = arith.constant 0 : i32
    return %arg0, %c0_i32 : i32, i32
  }
  func.func @transform_1(%arg0: i32) -> (i32, i32) {
    %c0_i32 = arith.constant 0 : i32
    %c0_i32_0 = arith.constant 0 : i32
    %c0_i32_1 = arith.constant 0 : i32
    return %c0_i32, %c0_i32_0 : i32, i32
  }
  func.func @transform_2(%arg0: i32) -> (i32, i32) {
    %c0_i32 = arith.constant 0 : i32
    %c0_i32_0 = arith.constant 0 : i32
    %c0_i32_1 = arith.constant 0 : i32
    return %c0_i32, %c0_i32_0 : i32, i32
  }
  func.func @transform_3(%arg0: i32) -> (i32, i32, i32) {
    %c0_i32 = arith.constant 0 : i32
    %c0_i32_0 = arith.constant 0 : i32
    %c0_i32_1 = arith.constant 0 : i32
    %c0_i32_2 = arith.constant 0 : i32
    return %c0_i32, %c0_i32_0, %c0_i32_1 : i32, i32, i32
  }
  func.func @transform_4(%arg0: i32) -> (i32, i32, i32) {
    %c0_i32 = arith.constant 0 : i32
    %c0_i32_0 = arith.constant 0 : i32
    %c0_i32_1 = arith.constant 0 : i32
    %c0_i32_2 = arith.constant 0 : i32
    return %c0_i32, %c0_i32_0, %c0_i32_1 : i32, i32, i32
  }
  func.func @transform_5(%arg0: i32) -> (i32, i32) {
    %c0_i32 = arith.constant 0 : i32
    %c0_i32_0 = arith.constant 0 : i32
    %c0_i32_1 = arith.constant 0 : i32
    return %c0_i32, %c0_i32_0 : i32, i32
  }
  func.func @transform_6(%arg0: i32) -> (i32, i32) {
    %c0_i32 = arith.constant 0 : i32
    %c0_i32_0 = arith.constant 0 : i32
    %c0_i32_1 = arith.constant 0 : i32
    return %c0_i32, %c0_i32_0 : i32, i32
  }
  func.func @transform_7(%arg0: i32) -> (i32, i32) {
    %c0_i32 = arith.constant 0 : i32
    %c0_i32_0 = arith.constant 0 : i32
    return %arg0, %c0_i32 : i32, i32
  }
  func.func @transform_8(%arg0: i32) -> (i32, i32) {
    %c0_i32 = arith.constant 0 : i32
    %c0_i32_0 = arith.constant 0 : i32
    return %arg0, %c0_i32 : i32, i32
  }
}

</mosaic_0001>

<llo_original>
// kernel: tpu_custom_call.1
$region0: #{tpu_custom_call.1}
  #allocation0 [shape = 'u32[]', space=smem, size = 0x4, offset = 0x4, fixed_abs, tag = 'smem constant byte address 0x4 - core index']
  #allocation1 [shape = 'u32[144,128]{1,0:T(1,128)}', space=vmem, size = 0x12000, scoped, tag = 'internal scratch']
  %s0 = inlined_call_operand.hbm [shape: f32[8,128], index: 0, kind: input, shape index: {}]
  %s1 = inlined_call_operand.hbm [shape: f32[128,128], index: 1, kind: input, shape index: {}]
  %s2 = inlined_call_operand.vmem [shape: f32[1,128], index: 2, kind: input, shape index: {}]
  %s3 = inlined_call_operand.hbm [shape: f32[3,128,128], index: 3, kind: input, shape index: {}]
  %s4 = inlined_call_operand.vmem [shape: f32[3,1,128], index: 4, kind: input, shape index: {}]
  %s5 = inlined_call_operand.hbm [shape: f32[128,128], index: 5, kind: input, shape index: {}]
  %s6 = inlined_call_operand.vmem [shape: f32[1,128], index: 6, kind: input, shape index: {}]
  %s7 = inlined_call_operand.hbm [shape: f32[8,128], index: 7, kind: output, shape index: {0}]
  %s8 = inlined_call_operand.hbm [shape: f32[8,128], index: 8, kind: output, shape index: {1}]
  %9 = xla_tuple %s7, %s8
  %s10 = sld [smem:[#allocation0]]
  $region62: #{tpu_custom_call.1} parent=0
    _
  %s12 = ssub.s32 1, %s10
  %s13 = scalar_select 0, %s12, %s10
  $region1: #{tpu_custom_call.1} parent=0
    #allocation2 [shape = 'u8[4096]{0}', space=vmem, size = 0x1000, scoped, tag = 'input window, operand 0, single buffered']
    #allocation3 [shape = 's32[1]{0}', space=sflag, size = 0x4, scoped, tag = 'scoped memory for tpu_custom_call.1']
    #allocation4 [shape = 's32[1]{0}', space=sflag, size = 0x4, scoped, tag = 'scoped memory for tpu_custom_call.1']
    #allocation5 [shape = 'u8[65536]{0}', space=vmem, size = 0x10000, scoped, tag = 'input window, operand 1, single buffered']
    #allocation6 [shape = 's32[1]{0}', space=sflag, size = 0x4, scoped, tag = 'scoped memory for tpu_custom_call.1']
    #allocation7 [shape = 'u8[196608]{0}', space=vmem, size = 0x30000, scoped, tag = 'input window, operand 3, single buffered']
    #allocation8 [shape = 'u8[65536]{0}', space=vmem, size = 0x10000, scoped, tag = 'input window, operand 5, single buffered']
    #allocation9 [shape = 's32[1]{0}', space=sflag, size = 0x4, scoped, tag = 'scoped memory for tpu_custom_call.1']
    #allocation10 [shape = 'u8[4096]{0}', space=vmem, size = 0x1000, scoped, tag = 'output window, operand 0, single buffered']
    #allocation11 [shape = 'u8[4096]{0}', space=vmem, size = 0x1000, scoped, tag = 'output window, operand 1, single buffered']
    #allocation12 [shape = 's32[1]{0}', space=sflag, size = 0x4, scoped, tag = 'scoped memory for tpu_custom_call.1']
    %14 = vsyncpa [#allocation3], 0
    %15 = vsyncpa [#allocation6], 0
    %16 = vsyncpa [#allocation9], 0
    %17 = vsyncpa [#allocation4], 0
    %18 = vsyncpa [#allocation12], 0
    // Predicated region
    $region2: #{tpu_custom_call.1} parent=1 // pred_check
      _
    $region3: #{tpu_custom_call.1} parent=1 // pred_check_branch
      %20 = sbr.rel (0) target = $region5
    $region4: #{tpu_custom_call.1} parent=1 // pred_region
      %s22 = ssub.s32 128, 128
      %23 = vsyncadd [#allocation3], %s22
      %s25 = sshll.u32 [#allocation2], 4
      %s26 = int_to_ptr.vmem [resolvable:$true] %s25
      %28 = dma.hbm_to_vmem [thread:$0]  %s0, 128, %s26, [#allocation3]
    $region5: #{tpu_custom_call.1} parent=1 // pred_fallthru
      _
    // Predicated region
    $region6: #{tpu_custom_call.1} parent=1 // pred_check
      _
    $region7: #{tpu_custom_call.1} parent=1 // pred_check_branch
      %30 = sbr.rel (0) target = $region9
    $region8: #{tpu_custom_call.1} parent=1 // pred_region
      %s32 = ssub.s32 2048, 2048
      %33 = vsyncadd [#allocation6], %s32
      %s34 = sshll.u32 [#allocation5], 4
      %s35 = int_to_ptr.vmem [resolvable:$true] %s34
      %40 = dma.hbm_to_vmem [thread:$0]  %s1, 2048, %s35, [#allocation6], 128, 128, 8
    $region9: #{tpu_custom_call.1} parent=1 // pred_fallthru
      _
    // Predicated region
    $region10: #{tpu_custom_call.1} parent=1 // pred_check
      _
    $region11: #{tpu_custom_call.1} parent=1 // pred_check_branch
      %42 = sbr.rel (0) target = $region13
    $region12: #{tpu_custom_call.1} parent=1 // pred_region
      _
    $region13: #{tpu_custom_call.1} parent=1 // pred_fallthru
      _
    // Predicated region
    $region14: #{tpu_custom_call.1} parent=1 // pred_check
      _
    $region15: #{tpu_custom_call.1} parent=1 // pred_check_branch
      %44 = sbr.rel (0) target = $region17
    $region16: #{tpu_custom_call.1} parent=1 // pred_region
      %s46 = ssub.s32 6144, 6144
      %47 = vsyncadd [#allocation6], %s46
      %s48 = sshll.u32 [#allocation7], 4
      %s49 = int_to_ptr.vmem [resolvable:$true] %s48
      %54 = dma.hbm_to_vmem [thread:$0]  %s3, 6144, %s49, [#allocation6], 128, 128, 8
    $region17: #{tpu_custom_call.1} parent=1 // pred_fallthru
      _
    // Predicated region
    $region18: #{tpu_custom_call.1} parent=1 // pred_check
      _
    $region19: #{tpu_custom_call.1} parent=1 // pred_check_branch
      %56 = sbr.rel (0) target = $region21
    $region20: #{tpu_custom_call.1} parent=1 // pred_region
      _
    $region21: #{tpu_custom_call.1} parent=1 // pred_fallthru
      _
    // Predicated region
    $region22: #{tpu_custom_call.1} parent=1 // pred_check
      _
    $region23: #{tpu_custom_call.1} parent=1 // pred_check_branch
      %58 = sbr.rel (0) target = $region25
    $region24: #{tpu_custom_call.1} parent=1 // pred_region
      %s60 = ssub.s32 2048, 2048
      %61 = vsyncadd [#allocation9], %s60
      %s62 = sshll.u32 [#allocation8], 4
      %s63 = int_to_ptr.vmem [resolvable:$true] %s62
      %68 = dma.hbm_to_vmem [thread:$0]  %s5, 2048, %s63, [#allocation9], 128, 128, 8
    $region25: #{tpu_custom_call.1} parent=1 // pred_fallthru
      _
    // Predicated region
    $region26: #{tpu_custom_call.1} parent=1 // pred_check
      _
    $region27: #{tpu_custom_call.1} parent=1 // pred_check_branch
      %70 = sbr.rel (0) target = $region29
    $region28: #{tpu_custom_call.1} parent=1 // pred_region
      _
    $region29: #{tpu_custom_call.1} parent=1 // pred_fallthru
      _
    // Predicated region
    $region30: #{tpu_custom_call.1} parent=1 // pred_check
      _
    $region31: #{tpu_custom_call.1} parent=1 // pred_check_branch
      %72 = sbr.rel (0) target = $region33
    $region32: #{tpu_custom_call.1} parent=1 // pred_region
      %73 = dma.done [#allocation3], 128
    $region33: #{tpu_custom_call.1} parent=1 // pred_fallthru
      _
    // Predicated region
    $region34: #{tpu_custom_call.1} parent=1 // pred_check
      _
    $region35: #{tpu_custom_call.1} parent=1 // pred_check_branch
      %75 = sbr.rel (0) target = $region37
    $region36: #{tpu_custom_call.1} parent=1 // pred_region
      %76 = dma.done [#allocation6], 2048
    $region37: #{tpu_custom_call.1} parent=1 // pred_fallthru
      _
    // Predicated region
    $region38: #{tpu_custom_call.1} parent=1 // pred_check
      _
    $region39: #{tpu_custom_call.1} parent=1 // pred_check_branch
      %78 = sbr.rel (0) target = $region41
    $region40: #{tpu_custom_call.1} parent=1 // pred_region
      %79 = dma.done [#allocation6], 6144
    $region41: #{tpu_custom_call.1} parent=1 // pred_fallthru
      _
    // Predicated region
    $region42: #{tpu_custom_call.1} parent=1 // pred_check
      _
    $region43: #{tpu_custom_call.1} parent=1 // pred_check_branch
      %81 = sbr.rel (0) target = $region45
    $region44: #{tpu_custom_call.1} parent=1 // pred_region
      %82 = dma.done [#allocation9], 2048
    $region45: #{tpu_custom_call.1} parent=1 // pred_fallthru
      _
    %v83 = vld [vmem:[#allocation2] sm:$0xff]
    %v84 = vld [vmem:[#allocation5] sm:$0xff]
    %v85 = vld [vmem:[#allocation5 + $0x8] sm:$0xff]
    %v86 = vld [vmem:[#allocation5 + $0x10] sm:$0xff]
    %v87 = vld [vmem:[#allocation5 + $0x18] sm:$0xff]
    %v88 = vld [vmem:[#allocation5 + $0x20] sm:$0xff]
    %v89 = vld [vmem:[#allocation5 + $0x28] sm:$0xff]
    %v90 = vld [vmem:[#allocation5 + $0x30] sm:$0xff]
    %v91 = vld [vmem:[#allocation5 + $0x38] sm:$0xff]
    %v92 = vld [vmem:[#allocation5 + $0x40] sm:$0xff]
    %v93 = vld [vmem:[#allocation5 + $0x48] sm:$0xff]
    %v94 = vld [vmem:[#allocation5 + $0x50] sm:$0xff]
    %v95 = vld [vmem:[#allocation5 + $0x58] sm:$0xff]
    %v96 = vld [vmem:[#allocation5 + $0x60] sm:$0xff]
    %v97 = vld [vmem:[#allocation5 + $0x68] sm:$0xff]
    %v98 = vld [vmem:[#allocation5 + $0x70] sm:$0xff]
    %v99 = vld [vmem:[#allocation5 + $0x78] sm:$0xff]
    %v100 = vld [vmem:[%s2] sm:$0x1]
    %v102 = vlaneseq
    %v103 = vshrl.u32 %v102, 7
    %v104 = vsub.s32 0, %v103
    %v105 = vrot.slane %v100, %v104
    %107 = vmatprep.subr.mxu0 0.0
    %108 = vmatpush1.msra.mxu0 %v84
    %109 = vmatprep.subr.mxu0 0.0
    %110 = vmatpush1.msra.mxu0 %v85
    %111 = vmatprep.subr.mxu0 0.0
    %112 = vmatpush1.msra.mxu0 %v86
    %113 = vmatprep.subr.mxu0 0.0
    %114 = vmatpush1.msra.mxu0 %v87
    %115 = vmatprep.subr.mxu0 0.0
    %116 = vmatpush1.msra.mxu0 %v88
    %117 = vmatprep.subr.mxu0 0.0
    %118 = vmatpush1.msra.mxu0 %v89
    %119 = vmatprep.subr.mxu0 0.0
    %120 = vmatpush1.msra.mxu0 %v90
    %121 = vmatprep.subr.mxu0 0.0
    %122 = vmatpush1.msra.mxu0 %v91
    %123 = vmatprep.subr.mxu0 0.0
    %124 = vmatpush1.msra.mxu0 %v92
    %125 = vmatprep.subr.mxu0 0.0
    %126 = vmatpush1.msra.mxu0 %v93
    %127 = vmatprep.subr.mxu0 0.0
    %128 = vmatpush1.msra.mxu0 %v94
    %129 = vmatprep.subr.mxu0 0.0
    %130 = vmatpush1.msra.mxu0 %v95
    %131 = vmatprep.subr.mxu0 0.0
    %132 = vmatpush1.msra.mxu0 %v96
    %133 = vmatprep.subr.mxu0 0.0
    %134 = vmatpush1.msra.mxu0 %v97
    %135 = vmatprep.subr.mxu0 0.0
    %136 = vmatpush1.msra.mxu0 %v98
    %137 = vmatprep.subr.mxu0 0.0
    %138 = vmatpush1.msra.mxu0 %v99
    %139 = vmatprep.subr.mxu0 0.0
    %140 = vmatpush1.msra.mxu0 0.0
    %141 = vmatprep.subr.mxu0 0.0
    %142 = vmatpush1.msra.mxu0 0.0
    %143 = vmatprep.subr.mxu0 0.0
    %144 = vmatpush1.msra.mxu0 0.0
    %145 = vmatprep.subr.mxu0 0.0
    %146 = vmatpush1.msra.mxu0 0.0
    %147 = vmatprep.subr.mxu0 0.0
    %148 = vmatpush1.msra.mxu0 0.0
    %149 = vmatprep.subr.mxu0 0.0
    %150 = vmatpush1.msra.mxu0 0.0
    %151 = vmatprep.subr.mxu0 0.0
    %152 = vmatpush1.msra.mxu0 0.0
    %153 = vmatprep.subr.mxu0 0.0
    %154 = vmatpush1.msra.mxu0 0.0
    %155 = vmatprep.subr.mxu0 0.0
    %156 = vmatpush1.msra.mxu0 0.0
    %157 = vmatprep.subr.mxu0 0.0
    %158 = vmatpush1.msra.mxu0 0.0
    %159 = vmatprep.subr.mxu0 0.0
    %160 = vmatpush1.msra.mxu0 0.0
    %161 = vmatprep.subr.mxu0 0.0
    %162 = vmatpush1.msra.mxu0 0.0
    %163 = vmatprep.subr.mxu0 0.0
    %164 = vmatpush1.msra.mxu0 0.0
    %165 = vmatprep.subr.mxu0 0.0
    %166 = vmatpush1.msra.mxu0 0.0
    %167 = vmatprep.subr.mxu0 0.0
    %168 = vmatpush1.msra.mxu0 0.0
    %169 = vmatprep.subr.mxu0 0.0
    %170 = vmatpush1.msra.mxu0 0.0
    %171 = vmatprep.mubr.f32.mxu0 0.0
    %172 = vmatmul.mubr.f32.gmra.mrb[0].mxu0 %v83
    %v173 = vpop.f32.mrb[0].mxu0
    %v174 = vadd.f32 %v105, %v173
    %v175 = vpop.f32.mrb[0].mxu0
    %176 = vdwg.mxu0
    %v177 = vmax.f32 %v174, 0.0
    %v178 = vld [vmem:[#allocation7] sm:$0xff]
    %v179 = vld [vmem:[#allocation7 + $0x8] sm:$0xff]
    %v180 = vld [vmem:[#allocation7 + $0x10] sm:$0xff]
    %v181 = vld [vmem:[#allocation7 + $0x18] sm:$0xff]
    %v182 = vld [vmem:[#allocation7 + $0x20] sm:$0xff]
    %v183 = vld [vmem:[#allocation7 + $0x28] sm:$0xff]
    %v184 = vld [vmem:[#allocation7 + $0x30] sm:$0xff]
    %v185 = vld [vmem:[#allocation7 + $0x38] sm:$0xff]
    %v186 = vld [vmem:[#allocation7 + $0x40] sm:$0xff]
    %v187 = vld [vmem:[#allocation7 + $0x48] sm:$0xff]
    %v188 = vld [vmem:[#allocation7 + $0x50] sm:$0xff]
    %v189 = vld [vmem:[#allocation7 + $0x58] sm:$0xff]
    %v190 = vld [vmem:[#allocation7 + $0x60] sm:$0xff]
    %v191 = vld [vmem:[#allocation7 + $0x68] sm:$0xff]
    %v192 = vld [vmem:[#allocation7 + $0x70] sm:$0xff]
    %v193 = vld [vmem:[#allocation7 + $0x78] sm:$0xff]
    %v194 = vld [vmem:[%s4] sm:$0x1]
    %v196 = vlaneseq
    %v197 = vshrl.u32 %v196, 7
    %v198 = vsub.s32 0, %v197
    %v199 = vrot.slane %v194, %v198
    %201 = vmatprep.subr.mxu0 0.0
    %202 = vmatpush1.msra.mxu0 %v178
    %203 = vmatprep.subr.mxu0 0.0
    %204 = vmatpush1.msra.mxu0 %v179
    %205 = vmatprep.subr.mxu0 0.0
    %206 = vmatpush1.msra.mxu0 %v180
    %207 = vmatprep.subr.mxu0 0.0
    %208 = vmatpush1.msra.mxu0 %v181
    %209 = vmatprep.subr.mxu0 0.0
    %210 = vmatpush1.msra.mxu0 %v182
    %211 = vmatprep.subr.mxu0 0.0
    %212 = vmatpush1.msra.mxu0 %v183
    %213 = vmatprep.subr.mxu0 0.0
    %214 = vmatpush1.msra.mxu0 %v184
    %215 = vmatprep.subr.mxu0 0.0
    %216 = vmatpush1.msra.mxu0 %v185
    %217 = vmatprep.subr.mxu0 0.0
    %218 = vmatpush1.msra.mxu0 %v186
    %219 = vmatprep.subr.mxu0 0.0
    %220 = vmatpush1.msra.mxu0 %v187
    %221 = vmatprep.subr.mxu0 0.0
    %222 = vmatpush1.msra.mxu0 %v188
    %223 = vmatprep.subr.mxu0 0.0
    %224 = vmatpush1.msra.mxu0 %v189
    %225 = vmatprep.subr.mxu0 0.0
    %226 = vmatpush1.msra.mxu0 %v190
    %227 = vmatprep.subr.mxu0 0.0
    %228 = vmatpush1.msra.mxu0 %v191
    %229 = vmatprep.subr.mxu0 0.0
    %230 = vmatpush1.msra.mxu0 %v192
    %231 = vmatprep.subr.mxu0 0.0
    %232 = vmatpush1.msra.mxu0 %v193
    %233 = vmatprep.subr.mxu0 0.0
    %234 = vmatpush1.msra.mxu0 0.0
    %235 = vmatprep.subr.mxu0 0.0
    %236 = vmatpush1.msra.mxu0 0.0
    %237 = vmatprep.subr.mxu0 0.0
    %238 = vmatpush1.msra.mxu0 0.0
    %239 = vmatprep.subr.mxu0 0.0
    %240 = vmatpush1.msra.mxu0 0.0
    %241 = vmatprep.subr.mxu0 0.0
    %242 = vmatpush1.msra.mxu0 0.0
    %243 = vmatprep.subr.mxu0 0.0
    %244 = vmatpush1.msra.mxu0 0.0
    %245 = vmatprep.subr.mxu0 0.0
    %246 = vmatpush1.msra.mxu0 0.0
    %247 = vmatprep.subr.mxu0 0.0
    %248 = vmatpush1.msra.mxu0 0.0
    %249 = vmatprep.subr.mxu0 0.0
    %250 = vmatpush1.msra.mxu0 0.0
    %251 = vmatprep.subr.mxu0 0.0
    %252 = vmatpush1.msra.mxu0 0.0
    %253 = vmatprep.subr.mxu0 0.0
    %254 = vmatpush1.msra.mxu0 0.0
    %255 = vmatprep.subr.mxu0 0.0
    %256 = vmatpush1.msra.mxu0 0.0
    %257 = vmatprep.subr.mxu0 0.0
    %258 = vmatpush1.msra.mxu0 0.0
    %259 = vmatprep.subr.mxu0 0.0
    %260 = vmatpush1.msra.mxu0 0.0
    %261 = vmatprep.subr.mxu0 0.0
    %262 = vmatpush1.msra.mxu0 0.0
    %263 = vmatprep.subr.mxu0 0.0
    %264 = vmatpush1.msra.mxu0 0.0
    %265 = vmatprep.mubr.f32.mxu0 0.0
    %266 = vmatmul.mubr.f32.gmra.mrb[0].mxu0 %v177
    %v267 = vpop.f32.mrb[0].mxu0
    %v268 = vadd.f32 %v199, %v267
    %v269 = vpop.f32.mrb[0].mxu0
    %270 = vdwg.mxu0
    %v271 = vmax.f32 %v268, 0.0
    %s272 = scalar_lea.vmem [#allocation7], 128
    %v273 = vld [vmem:[%s272] sm:$0xff]
    %v274 = vld [vmem:[%s272 + $0x8] sm:$0xff]
    %v275 = vld [vmem:[%s272 + $0x10] sm:$0xff]
    %v276 = vld [vmem:[%s272 + $0x18] sm:$0xff]
    %v277 = vld [vmem:[%s272 + $0x20] sm:$0xff]
    %v278 = vld [vmem:[%s272 + $0x28] sm:$0xff]
    %v279 = vld [vmem:[%s272 + $0x30] sm:$0xff]
    %v280 = vld [vmem:[%s272 + $0x38] sm:$0xff]
    %v281 = vld [vmem:[%s272 + $0x40] sm:$0xff]
    %v282 = vld [vmem:[%s272 + $0x48] sm:$0xff]
    %v283 = vld [vmem:[%s272 + $0x50] sm:$0xff]
    %v284 = vld [vmem:[%s272 + $0x58] sm:$0xff]
    %v285 = vld [vmem:[%s272 + $0x60] sm:$0xff]
    %v286 = vld [vmem:[%s272 + $0x68] sm:$0xff]
    %v287 = vld [vmem:[%s272 + $0x70] sm:$0xff]
    %v288 = vld [vmem:[%s272 + $0x78] sm:$0xff]
    %s289 = scalar_lea.vmem %s4, 1
    %v290 = vld [vmem:[%s289] sm:$0x1]
    %v292 = vlaneseq
    %v293 = vshrl.u32 %v292, 7
    %v294 = vsub.s32 0, %v293
    %v295 = vrot.slane %v290, %v294
    %297 = vmatprep.subr.mxu0 0.0
    %298 = vmatpush1.msra.mxu0 %v273
    %299 = vmatprep.subr.mxu0 0.0
    %300 = vmatpush1.msra.mxu0 %v274
    %301 = vmatprep.subr.mxu0 0.0
    %302 = vmatpush1.msra.mxu0 %v275
    %303 = vmatprep.subr.mxu0 0.0
    %304 = vmatpush1.msra.mxu0 %v276
    %305 = vmatprep.subr.mxu0 0.0
    %306 = vmatpush1.msra.mxu0 %v277
    %307 = vmatprep.subr.mxu0 0.0
    %308 = vmatpush1.msra.mxu0 %v278
    %309 = vmatprep.subr.mxu0 0.0
    %310 = vmatpush1.msra.mxu0 %v279
    %311 = vmatprep.subr.mxu0 0.0
    %312 = vmatpush1.msra.mxu0 %v280
    %313 = vmatprep.subr.mxu0 0.0
    %314 = vmatpush1.msra.mxu0 %v281
    %315 = vmatprep.subr.mxu0 0.0
    %316 = vmatpush1.msra.mxu0 %v282
    %317 = vmatprep.subr.mxu0 0.0
    %318 = vmatpush1.msra.mxu0 %v283
    %319 = vmatprep.subr.mxu0 0.0
    %320 = vmatpush1.msra.mxu0 %v284
    %321 = vmatprep.subr.mxu0 0.0
    %322 = vmatpush1.msra.mxu0 %v285
    %323 = vmatprep.subr.mxu0 0.0
    %324 = vmatpush1.msra.mxu0 %v286
    %325 = vmatprep.subr.mxu0 0.0
    %326 = vmatpush1.msra.mxu0 %v287
    %327 = vmatprep.subr.mxu0 0.0
    %328 = vmatpush1.msra.mxu0 %v288
    %329 = vmatprep.subr.mxu0 0.0
    %330 = vmatpush1.msra.mxu0 0.0
    %331 = vmatprep.subr.mxu0 0.0
    %332 = vmatpush1.msra.mxu0 0.0
    %333 = vmatprep.subr.mxu0 0.0
    %334 = vmatpush1.msra.mxu0 0.0
    %335 = vmatprep.subr.mxu0 0.0
    %336 = vmatpush1.msra.mxu0 0.0
    %337 = vmatprep.subr.mxu0 0.0
    %338 = vmatpush1.msra.mxu0 0.0
    %339 = vmatprep.subr.mxu0 0.0
    %340 = vmatpush1.msra.mxu0 0.0
    %341 = vmatprep.subr.mxu0 0.0
    %342 = vmatpush1.msra.mxu0 0.0
    %343 = vmatprep.subr.mxu0 0.0
    %344 = vmatpush1.msra.mxu0 0.0
    %345 = vmatprep.subr.mxu0 0.0
    %346 = vmatpush1.msra.mxu0 0.0
    %347 = vmatprep.subr.mxu0 0.0
    %348 = vmatpush1.msra.mxu0 0.0
    %349 = vmatprep.subr.mxu0 0.0
    %350 = vmatpush1.msra.mxu0 0.0
    %351 = vmatprep.subr.mxu0 0.0
    %352 = vmatpush1.msra.mxu0 0.0
    %353 = vmatprep.subr.mxu0 0.0
    %354 = vmatpush1.msra.mxu0 0.0
    %355 = vmatprep.subr.mxu0 0.0
    %356 = vmatpush1.msra.mxu0 0.0
    %357 = vmatprep.subr.mxu0 0.0
    %358 = vmatpush1.msra.mxu0 0.0
    %359 = vmatprep.subr.mxu0 0.0
    %360 = vmatpush1.msra.mxu0 0.0
    %361 = vmatprep.mubr.f32.mxu0 0.0
    %362 = vmatmul.mubr.f32.gmra.mrb[0].mxu0 %v271
    %v363 = vpop.f32.mrb[0].mxu0
    %v364 = vadd.f32 %v295, %v363
    %v365 = vpop.f32.mrb[0].mxu0
    %366 = vdwg.mxu0
    %v367 = vmax.f32 %v364, 0.0
    %s368 = scalar_lea.vmem [#allocation7], 256
    %v369 = vld [vmem:[%s368] sm:$0xff]
    %v370 = vld [vmem:[%s368 + $0x8] sm:$0xff]
    %v371 = vld [vmem:[%s368 + $0x10] sm:$0xff]
    %v372 = vld [vmem:[%s368 + $0x18] sm:$0xff]
    %v373 = vld [vmem:[%s368 + $0x20] sm:$0xff]
    %v374 = vld [vmem:[%s368 + $0x28] sm:$0xff]
    %v375 = vld [vmem:[%s368 + $0x30] sm:$0xff]
    %v376 = vld [vmem:[%s368 + $0x38] sm:$0xff]
    %v377 = vld [vmem:[%s368 + $0x40] sm:$0xff]
    %v378 = vld [vmem:[%s368 + $0x48] sm:$0xff]
    %v379 = vld [vmem:[%s368 + $0x50] sm:$0xff]
    %v380 = vld [vmem:[%s368 + $0x58] sm:$0xff]
    %v381 = vld [vmem:[%s368 + $0x60] sm:$0xff]
    %v382 = vld [vmem:[%s368 + $0x68] sm:$0xff]
    %v383 = vld [vmem:[%s368 + $0x70] sm:$0xff]
    %v384 = vld [vmem:[%s368 + $0x78] sm:$0xff]
    %s385 = scalar_lea.vmem %s4, 2
    %v386 = vld [vmem:[%s385] sm:$0x1]
    %v388 = vlaneseq
    %v389 = vshrl.u32 %v388, 7
    %v390 = vsub.s32 0, %v389
    %v391 = vrot.slane %v386, %v390
    %393 = vmatprep.subr.mxu0 0.0
    %394 = vmatpush1.msra.mxu0 %v369
    %395 = vmatprep.subr.mxu0 0.0
    %396 = vmatpush1.msra.mxu0 %v370
    %397 = vmatprep.subr.mxu0 0.0
    %398 = vmatpush1.msra.mxu0 %v371
    %399 = vmatprep.subr.mxu0 0.0
    %400 = vmatpush1.msra.mxu0 %v372
    %401 = vmatprep.subr.mxu0 0.0
    %402 = vmatpush1.msra.mxu0 %v373
    %403 = vmatprep.subr.mxu0 0.0
    %404 = vmatpush1.msra.mxu0 %v374
    %405 = vmatprep.subr.mxu0 0.0
    %406 = vmatpush1.msra.mxu0 %v375
    %407 = vmatprep.subr.mxu0 0.0
    %408 = vmatpush1.msra.mxu0 %v376
    %409 = vmatprep.subr.mxu0 0.0
    %410 = vmatpush1.msra.mxu0 %v377
    %411 = vmatprep.subr.mxu0 0.0
    %412 = vmatpush1.msra.mxu0 %v378
    %413 = vmatprep.subr.mxu0 0.0
    %414 = vmatpush1.msra.mxu0 %v379
    %415 = vmatprep.subr.mxu0 0.0
    %416 = vmatpush1.msra.mxu0 %v380
    %417 = vmatprep.subr.mxu0 0.0
    %418 = vmatpush1.msra.mxu0 %v381
    %419 = vmatprep.subr.mxu0 0.0
    %420 = vmatpush1.msra.mxu0 %v382
    %421 = vmatprep.subr.mxu0 0.0
    %422 = vmatpush1.msra.mxu0 %v383
    %423 = vmatprep.subr.mxu0 0.0
    %424 = vmatpush1.msra.mxu0 %v384
    %425 = vmatprep.subr.mxu0 0.0
    %426 = vmatpush1.msra.mxu0 0.0
    %427 = vmatprep.subr.mxu0 0.0
    %428 = vmatpush1.msra.mxu0 0.0
    %429 = vmatprep.subr.mxu0 0.0
    %430 = vmatpush1.msra.mxu0 0.0
    %431 = vmatprep.subr.mxu0 0.0
    %432 = vmatpush1.msra.mxu0 0.0
    %433 = vmatprep.subr.mxu0 0.0
    %434 = vmatpush1.msra.mxu0 0.0
    %435 = vmatprep.subr.mxu0 0.0
    %436 = vmatpush1.msra.mxu0 0.0
    %437 = vmatprep.subr.mxu0 0.0
    %438 = vmatpush1.msra.mxu0 0.0
    %439 = vmatprep.subr.mxu0 0.0
    %440 = vmatpush1.msra.mxu0 0.0
    %441 = vmatprep.subr.mxu0 0.0
    %442 = vmatpush1.msra.mxu0 0.0
    %443 = vmatprep.subr.mxu0 0.0
    %444 = vmatpush1.msra.mxu0 0.0
    %445 = vmatprep.subr.mxu0 0.0
    %446 = vmatpush1.msra.mxu0 0.0
    %447 = vmatprep.subr.mxu0 0.0
    %448 = vmatpush1.msra.mxu0 0.0
    %449 = vmatprep.subr.mxu0 0.0
    %450 = vmatpush1.msra.mxu0 0.0
    %451 = vmatprep.subr.mxu0 0.0
    %452 = vmatpush1.msra.mxu0 0.0
    %453 = vmatprep.subr.mxu0 0.0
    %454 = vmatpush1.msra.mxu0 0.0
    %455 = vmatprep.subr.mxu0 0.0
    %456 = vmatpush1.msra.mxu0 0.0
    %457 = vmatprep.mubr.f32.mxu0 0.0
    %458 = vmatmul.mubr.f32.gmra.mrb[0].mxu0 %v367
    %v459 = vpop.f32.mrb[0].mxu0
    %v460 = vadd.f32 %v391, %v459
    %v461 = vpop.f32.mrb[0].mxu0
    %462 = vdwg.mxu0
    %v463 = vmax.f32 %v460, 0.0
    %v464 = vld [vmem:[#allocation8] sm:$0xff]
    %v465 = vld [vmem:[#allocation8 + $0x8] sm:$0xff]
    %v466 = vld [vmem:[#allocation8 + $0x10] sm:$0xff]
    %v467 = vld [vmem:[#allocation8 + $0x18] sm:$0xff]
    %v468 = vld [vmem:[#allocation8 + $0x20] sm:$0xff]
    %v469 = vld [vmem:[#allocation8 + $0x28] sm:$0xff]
    %v470 = vld [vmem:[#allocation8 + $0x30] sm:$0xff]
    %v471 = vld [vmem:[#allocation8 + $0x38] sm:$0xff]
    %v472 = vld [vmem:[#allocation8 + $0x40] sm:$0xff]
    %v473 = vld [vmem:[#allocation8 + $0x48] sm:$0xff]
    %v474 = vld [vmem:[#allocation8 + $0x50] sm:$0xff]
    %v475 = vld [vmem:[#allocation8 + $0x58] sm:$0xff]
    %v476 = vld [vmem:[#allocation8 + $0x60] sm:$0xff]
    %v477 = vld [vmem:[#allocation8 + $0x68] sm:$0xff]
    %v478 = vld [vmem:[#allocation8 + $0x70] sm:$0xff]
    %v479 = vld [vmem:[#allocation8 + $0x78] sm:$0xff]
    %v480 = vld [vmem:[%s6] sm:$0x1]
    %v482 = vlaneseq
    %v483 = vshrl.u32 %v482, 7
    %v484 = vsub.s32 0, %v483
    %v485 = vrot.slane %v480, %v484
    %487 = vmatprep.subr.mxu0 0.0
    %488 = vmatpush1.msra.mxu0 %v464
    %489 = vmatprep.subr.mxu0 0.0
    %490 = vmatpush1.msra.mxu0 %v465
    %491 = vmatprep.subr.mxu0 0.0
    %492 = vmatpush1.msra.mxu0 %v466
    %493 = vmatprep.subr.mxu0 0.0
    %494 = vmatpush1.msra.mxu0 %v467
    %495 = vmatprep.subr.mxu0 0.0
    %496 = vmatpush1.msra.mxu0 %v468
    %497 = vmatprep.subr.mxu0 0.0
    %498 = vmatpush1.msra.mxu0 %v469
    %499 = vmatprep.subr.mxu0 0.0
    %500 = vmatpush1.msra.mxu0 %v470
    %501 = vmatprep.subr.mxu0 0.0
    %502 = vmatpush1.msra.mxu0 %v471
    %503 = vmatprep.subr.mxu0 0.0
    %504 = vmatpush1.msra.mxu0 %v472
    %505 = vmatprep.subr.mxu0 0.0
    %506 = vmatpush1.msra.mxu0 %v473
    %507 = vmatprep.subr.mxu0 0.0
    %508 = vmatpush1.msra.mxu0 %v474
    %509 = vmatprep.subr.mxu0 0.0
    %510 = vmatpush1.msra.mxu0 %v475
    %511 = vmatprep.subr.mxu0 0.0
    %512 = vmatpush1.msra.mxu0 %v476
    %513 = vmatprep.subr.mxu0 0.0
    %514 = vmatpush1.msra.mxu0 %v477
    %515 = vmatprep.subr.mxu0 0.0
    %516 = vmatpush1.msra.mxu0 %v478
    %517 = vmatprep.subr.mxu0 0.0
    %518 = vmatpush1.msra.mxu0 %v479
    %519 = vmatprep.subr.mxu0 0.0
    %520 = vmatpush1.msra.mxu0 0.0
    %521 = vmatprep.subr.mxu0 0.0
    %522 = vmatpush1.msra.mxu0 0.0
    %523 = vmatprep.subr.mxu0 0.0
    %524 = vmatpush1.msra.mxu0 0.0
    %525 = vmatprep.subr.mxu0 0.0
    %526 = vmatpush1.msra.mxu0 0.0
    %527 = vmatprep.subr.mxu0 0.0
    %528 = vmatpush1.msra.mxu0 0.0
    %529 = vmatprep.subr.mxu0 0.0
    %530 = vmatpush1.msra.mxu0 0.0
    %531 = vmatprep.subr.mxu0 0.0
    %532 = vmatpush1.msra.mxu0 0.0
    %533 = vmatprep.subr.mxu0 0.0
    %534 = vmatpush1.msra.mxu0 0.0
    %535 = vmatprep.subr.mxu0 0.0
    %536 = vmatpush1.msra.mxu0 0.0
    %537 = vmatprep.subr.mxu0 0.0
    %538 = vmatpush1.msra.mxu0 0.0
    %539 = vmatprep.subr.mxu0 0.0
    %540 = vmatpush1.msra.mxu0 0.0
    %541 = vmatprep.subr.mxu0 0.0
    %542 = vmatpush1.msra.mxu0 0.0
    %543 = vmatprep.subr.mxu0 0.0
    %544 = vmatpush1.msra.mxu0 0.0
    %545 = vmatprep.subr.mxu0 0.0
    %546 = vmatpush1.msra.mxu0 0.0
    %547 = vmatprep.subr.mxu0 0.0
    %548 = vmatpush1.msra.mxu0 0.0
    %549 = vmatprep.subr.mxu0 0.0
    %550 = vmatpush1.msra.mxu0 0.0
    %551 = vmatprep.mubr.f32.mxu0 0.0
    %552 = vmatmul.mubr.f32.gmra.mrb[0].mxu0 %v463
    %v553 = vpop.f32.mrb[0].mxu0
    %v554 = vadd.f32 %v485, %v553
    %v555 = vpop.f32.mrb[0].mxu0
    %556 = vdwg.mxu0
    %v557 = vtanh.pop %v554
    %558 = vst [vmem:[#allocation11] sm:$0xff] %v557
    %v559 = vlaneseq
    %v560 = vand.u32 %v559, 127
    %vm561 = vcmp.lt.s32.totalorder %v560, 7
    %v562 = vsel %vm561, %v554, -1e+30
    %563 = vmax.xlane.f32.xlu0 %v562
    %v564 = vpop.xlane.xlu0 %563
    %v565 = vsub.f32 %v562, %v564
    %v566 = vmul.f32 %v565, 1.442695
    %v567 = vpow.pop %v566
    %568 = vadd.xlane.f32.xlu0 %v567
    %v569 = vpop.xlane.xlu0 %568
    %v570 = vrcp.pop %v569
    %v571 = vmul.f32 %v567, %v570
    %572 = vst [vmem:[#allocation10] sm:$0xff] %v571
    // Predicated region
    $region46: #{tpu_custom_call.1} parent=1 // pred_check
      _
    $region47: #{tpu_custom_call.1} parent=1 // pred_check_branch
      %574 = sbr.rel (0) target = $region49
    $region48: #{tpu_custom_call.1} parent=1 // pred_region
      %s576 = ssub.s32 128, 128
      %577 = vsyncadd [#allocation4], %s576
      %s579 = sshll.u32 [#allocation10], 4
      %s580 = int_to_ptr.vmem [resolvable:$true] %s579
      %582 = dma.vmem_to_hbm [thread:$0]  %s580, 128, %s7, [#allocation4]
    $region49: #{tpu_custom_call.1} parent=1 // pred_fallthru
      _
    // Predicated region
    $region50: #{tpu_custom_call.1} parent=1 // pred_check
      _
    $region51: #{tpu_custom_call.1} parent=1 // pred_check_branch
      %584 = sbr.rel (0) target = $region53
    $region52: #{tpu_custom_call.1} parent=1 // pred_region
      %s586 = ssub.s32 128, 128
      %587 = vsyncadd [#allocation12], %s586
      %s589 = sshll.u32 [#allocation11], 4
      %s590 = int_to_ptr.vmem [resolvable:$true] %s589
      %592 = dma.vmem_to_hbm [thread:$0]  %s590, 128, %s8, [#allocation12]
    $region53: #{tpu_custom_call.1} parent=1 // pred_fallthru
      _
    // Predicated region
    $region54: #{tpu_custom_call.1} parent=1 // pred_check
      _
    $region55: #{tpu_custom_call.1} parent=1 // pred_check_branch
      %594 = sbr.rel (0) target = $region57
    $region56: #{tpu_custom_call.1} parent=1 // pred_region
      %595 = dma.done [#allocation4], 128
    $region57: #{tpu_custom_call.1} parent=1 // pred_fallthru
      _
    // Predicated region
    $region58: #{tpu_custom_call.1} parent=1 // pred_check
      _
    $region59: #{tpu_custom_call.1} parent=1 // pred_check_branch
      %597 = sbr.rel (0) target = $region61
    $region60: #{tpu_custom_call.1} parent=1 // pred_region
      %598 = dma.done [#allocation12], 128
    $region61: #{tpu_custom_call.1} parent=1 // pred_fallthru
      _
    %599 = vsyncpa [#allocation3], 1
    %600 = vsyncpa [#allocation6], 1
    %601 = vsyncpa [#allocation9], 1
    %602 = vsyncpa [#allocation4], 1
    %603 = vsyncpa [#allocation12], 1

</llo_original>
